<compile_context>
chip_gen: v5e
topology: v5e:2x2
jax: 0.10.0
libtpu: 0.0.40
codegen_flags: <defaults>
</compile_context>

<pallas_src>
import functools

import jax
import jax.numpy as jnp
from jax.experimental import pallas as pl
from jax.experimental.pallas import tpu as pltpu

LANES = 128
ACC_UNIT = 64          # rows per partial-sum slab (multiple of 8/16/32)
EPS = 1e-10


def _cdiv(a, b):
    return -(-a // b)


def _round_up(a, b):
    return _cdiv(a, b) * b


def _pow(x, gamma):
    # gamma is a static Python float (2.0 in the reference module).
    if float(gamma).is_integer():
        return jax.lax.integer_pow(x, int(gamma))
    return jnp.power(x, jnp.float32(gamma))


def _focal_kernel(p_ref, t_ref, out_ref, *, gamma, omega0, omega1,
                  block_rows, acc_rows, blocks_per_core, n_elem,
                  apply_mask, binary_targets):
    """One (block_rows, 128) tile -> accumulate into an (acc_rows, 128) slab."""
    c = pl.program_id(0)          # core slot ('parallel') axis
    i = pl.program_id(1)          # reduction ('arbitrary') axis

    # Cast per-vreg on load; inputs may be bf16/f16/f32 in HBM (halves DMA
    # bytes for bf16 while keeping f32 VPU/EUP math).
    p = p_ref[...].astype(jnp.float32)
    t = t_ref[...].astype(jnp.float32)

    if binary_targets:
        # Single-log fast path, valid only for hard {0,1} targets.
        pos = t > 0.5
        q = jnp.where(pos, p, 1.0 - p)
        w = jnp.where(pos, jnp.float32(-omega1), jnp.float32(-omega0))
        loss = w * _pow(1.0 - q, gamma) * jnp.log(q + EPS)
    else:
        # Exact two-term formulation (matches the PyTorch module for any t).
        loss = ((-omega0) * _pow(p, gamma) * (1.0 - t) * jnp.log(1.0 - p + EPS)
                + (-omega1) * _pow(1.0 - p, gamma) * t * jnp.log(p + EPS))

    if apply_mask:
        # Zero out: sub-128 tail lanes, rows past the end of the array in the
        # ragged last block, and fully-out-of-range duplicate block slots.
        # Select-based masking is immune to NaN/Inf in the garbage region.
        row = jax.lax.broadcasted_iota(jnp.int32, (block_rows, LANES), 0)
        lane = jax.lax.broadcasted_iota(jnp.int32, (block_rows, LANES), 1)
        start_row = (c * blocks_per_core + i) * block_rows
        flat = (start_row + row) * LANES + lane
        loss = jnp.where(flat < n_elem, loss, 0.0)

    # (block_rows,128) -> (acc_rows,128): pure VPU vreg adds with >= 8
    # independent accumulator vregs (no serial single-vreg add chain).
    if block_rows == acc_rows:
        partial = loss
    else:
        partial = loss.reshape(-1, acc_rows, LANES).sum(axis=0)

    @pl.when(i == 0)
    def _():
        out_ref[...] = jnp.zeros_like(out_ref)

    out_ref[...] += partial


def weighted_focal_loss(predict, target, *, gamma=2.0, omega0=0.25,
                        omega1=0.25, reduction='mean', tile_rows=2048,
                        binary_targets=False):
    if reduction not in ('mean', 'sum'):
        raise ValueError(f"unsupported reduction: {reduction}")
    assert predict.shape == target.shape
    n_elem = predict.size

    # Flatten in the original dtype -- a free bitcast reshape, no HBM copy.
    p_flat = predict.reshape(-1)
    t_flat = target.reshape(-1)

    # Only a sub-128-element tail ever needs padding (to present a lane-dense
    # 2-D view); its value is irrelevant because of the in-kernel mask.
    tail = (-n_elem) % LANES
    if tail:
        # TODO(synk): a <128-element tail cannot be expressed as a rectangular
        # 2-D view without a relayout; this tiny pad is the only copy left.
        p_flat = jnp.pad(p_flat, (0, tail))
        t_flat = jnp.pad(t_flat, (0, tail))
    rows = (n_elem + tail) // LANES
    p2d = p_flat.reshape(rows, LANES)
    t2d = t_flat.reshape(rows, LANES)

    tile_rows = max(ACC_UNIT, _round_up(int(tile_rows), ACC_UNIT))

    if rows <= tile_rows:
        # Single full-array block (legal for any row count / dtype packing).
        ncores, bpc = 1, 1
        block_rows = rows
        acc_rows = rows
        n_blocks = 1
    else:
        # Two core slots (v7x megacore; cheap sequential loop on v5e/v6e),
        # `bpc` blocks per core sized to just cover `rows` (multiple of 64
        # satisfies the f32/bf16/int8 packing tiles and the acc slab).
        ncores = 2
        bpc = max(1, _cdiv(_cdiv(rows, ncores), tile_rows))
        block_rows = _round_up(_cdiv(rows, ncores * bpc), ACC_UNIT)
        acc_rows = ACC_UNIT
        n_blocks = _cdiv(rows, block_rows)

    capacity = ncores * bpc * block_rows * LANES
    apply_mask = capacity != n_elem

    kernel = functools.partial(
        _focal_kernel, gamma=gamma, omega0=omega0, omega1=omega1,
        block_rows=block_rows, acc_rows=acc_rows, blocks_per_core=bpc,
        n_elem=n_elem, apply_mask=apply_mask, binary_targets=binary_targets)

    # Clamp so any fully out-of-range duplicate slot re-reads a valid block;
    # its contribution is masked to zero in the kernel (unclamped index used
    # for the mask).
    def in_map(c, i):
        b = c * bpc + i
        if ncores * bpc > n_blocks:
            b = jnp.minimum(b, n_blocks - 1)
        return (b, 0)

    def out_map(c, i):
        return (c, 0)

    bytes_accessed = (p2d.size * p2d.dtype.itemsize
                      + t2d.size * t2d.dtype.itemsize
                      + ncores * acc_rows * LANES * 4)
    cost = pl.CostEstimate(
        flops=12 * capacity,
        transcendentals=(1 if binary_targets else 2) * capacity,
        bytes_accessed=bytes_accessed,
    )

    partials = pl.pallas_call(
        kernel,
        out_shape=jax.ShapeDtypeStruct((ncores * acc_rows, LANES), jnp.float32),
        grid=(ncores, bpc),
        in_specs=[pl.BlockSpec((block_rows, LANES), in_map),
                  pl.BlockSpec((block_rows, LANES), in_map)],
        out_specs=pl.BlockSpec((acc_rows, LANES), out_map),
        compiler_params=pltpu.CompilerParams(
            dimension_semantics=("parallel", "arbitrary")),
        cost_estimate=cost,
    )(p2d, t2d)

    # Tiny finalization in plain JAX.
    total = jnp.sum(partials)
    if reduction == 'mean':
        return total / n_elem
    return total


def _ref_weighted_focal_loss(predict, target, gamma=2.0, omega0=0.25,
                             omega1=0.25, reduction='mean'):
    p = predict.astype(jnp.float32)
    t = target.astype(jnp.float32)
    loss0 = -omega0 * p ** gamma * (1.0 - t) * jnp.log(1.0 - p + EPS)
    loss1 = -omega1 * (1.0 - p) ** gamma * t * jnp.log(p + EPS)
    if reduction == 'mean':
        return jnp.mean(loss0) + jnp.mean(loss1)
    return jnp.sum(loss0 + loss1)


if __name__ == "__main__":
    key = jax.random.PRNGKey(0)
    kp, kt, kp2, kt2, kp3, kt3 = jax.random.split(key, 6)

    # (1) Small NCHW-like segmentation prediction, 128-aligned (zero-copy path).
    shape = (2, 4, 16, 16)
    predict = jax.random.uniform(kp, shape, jnp.float32, minval=0.01, maxval=0.99)
    target = (jax.random.uniform(kt, shape, jnp.float32) > 0.5).astype(jnp.float32)

    loss = jax.block_until_ready(weighted_focal_loss(predict, target,
                                                     reduction='mean'))
    ref = _ref_weighted_focal_loss(predict, target, reduction='mean')
    assert jnp.allclose(loss, ref, rtol=1e-4, atol=1e-6), (loss, ref)

    loss_s = jax.block_until_ready(weighted_focal_loss(predict, target,
                                                       reduction='sum'))
    ref_s = _ref_weighted_focal_loss(predict, target, reduction='sum')
    assert jnp.allclose(loss_s, ref_s, rtol=1e-4, atol=1e-5), (loss_s, ref_s)

    # (2) bf16 inputs (kernel DMAs bf16, computes in f32).
    loss_bf = jax.block_until_ready(
        weighted_focal_loss(predict.astype(jnp.bfloat16),
                            target.astype(jnp.bfloat16), reduction='mean'))
    ref_bf = _ref_weighted_focal_loss(predict.astype(jnp.bfloat16),
                                      target.astype(jnp.bfloat16),
                                      reduction='mean')
    assert jnp.allclose(loss_bf, ref_bf, rtol=1e-4, atol=1e-6), (loss_bf, ref_bf)

    # (3) Odd, non-lane-aligned shape exercising the in-kernel tail mask.
    shape2 = (3, 5, 7)
    predict2 = jax.random.uniform(kp2, shape2, jnp.float32,
                                  minval=0.01, maxval=0.99)
    target2 = (jax.random.uniform(kt2, shape2, jnp.float32) > 0.5).astype(
        jnp.float32)
    loss2 = jax.block_until_ready(weighted_focal_loss(predict2, target2,
                                                      reduction='mean'))
    ref2 = _ref_weighted_focal_loss(predict2, target2, reduction='mean')
    assert jnp.allclose(loss2, ref2, rtol=1e-4, atol=1e-6), (loss2, ref2)

    # (4) Multi-block / two-core-slot path with a ragged last block, forced
    # via a small tile_rows so the test stays small.
    shape3 = (2, 4, 33, 33)   # 8712 elements -> 69 rows of 128 (+ 8-elem tail)
    predict3 = jax.random.uniform(kp3, shape3, jnp.float32,
                                  minval=0.01, maxval=0.99)
    target3 = (jax.random.uniform(kt3, shape3, jnp.float32) > 0.5).astype(
        jnp.float32)
    loss3 = jax.block_until_ready(weighted_focal_loss(predict3, target3,
                                                      reduction='mean',
                                                      tile_rows=64))
    ref3 = _ref_weighted_focal_loss(predict3, target3, reduction='mean')
    assert jnp.allclose(loss3, ref3, rtol=1e-4, atol=1e-6), (loss3, ref3)

    # (5) Single-log fast path for hard {0,1} targets.
    loss_b = jax.block_until_ready(
        weighted_focal_loss(predict, target, reduction='mean',
                            binary_targets=True))
    assert jnp.allclose(loss_b, ref, rtol=1e-4, atol=1e-6), (loss_b, ref)

    print("KERNEL_OK")
</pallas_src>

<mosaic_0001>
module attributes {stable_mosaic.version = 11 : i64} {
  func.func @_focal_kernel(%arg0: i32, %arg1: i32, %arg2: memref<16x128xf32, #tpu.memory_space<vmem>>, %arg3: memref<16x128xf32, #tpu.memory_space<vmem>>, %arg4: memref<16x128xf32, #tpu.memory_space<vmem>>) attributes {dimension_semantics = [#tpu.dimension_semantics<parallel>, #tpu.dimension_semantics<arbitrary>], iteration_bounds = array<i64: 1, 1>, scalar_prefetch = 0 : i64, scratch_operands = 0 : i64, tpu.core_type = #tpu.core_type<tc>, window_params = [{transform_indices = @transform_0, window_bounds = array<i64: 16, 128>}, {transform_indices = @transform_1, window_bounds = array<i64: 16, 128>}, {transform_indices = @transform_2, window_bounds = array<i64: 16, 128>}]} {
    %c0 = arith.constant 0 : index
    %c0_0 = arith.constant 0 : index
    %0 = vector.load %arg2[%c0, %c0_0] : memref<16x128xf32, #tpu.memory_space<vmem>>, vector<16x128xf32>
    %c0_1 = arith.constant 0 : index
    %c0_2 = arith.constant 0 : index
    %1 = vector.load %arg3[%c0_1, %c0_2] : memref<16x128xf32, #tpu.memory_space<vmem>>, vector<16x128xf32>
    %2 = arith.mulf %0, %0 : vector<16x128xf32>
    %cst = arith.constant -2.500000e-01 : f32
    %3 = vector.broadcast %cst : f32 to vector<16x128xf32>
    %4 = arith.mulf %3, %2 : vector<16x128xf32>
    %cst_3 = arith.constant 1.000000e+00 : f32
    %5 = vector.broadcast %cst_3 : f32 to vector<16x128xf32>
    %6 = arith.subf %5, %1 : vector<16x128xf32>
    %7 = arith.mulf %4, %6 : vector<16x128xf32>
    %cst_4 = arith.constant 1.000000e+00 : f32
    %8 = vector.broadcast %cst_4 : f32 to vector<16x128xf32>
    %9 = arith.subf %8, %0 : vector<16x128xf32>
    %cst_5 = arith.constant 1.000000e-10 : f32
    %10 = vector.broadcast %cst_5 : f32 to vector<16x128xf32>
    %11 = arith.addf %9, %10 : vector<16x128xf32>
    %12 = math.log %11 : vector<16x128xf32>
    %13 = arith.mulf %7, %12 : vector<16x128xf32>
    %cst_6 = arith.constant 1.000000e+00 : f32
    %14 = vector.broadcast %cst_6 : f32 to vector<16x128xf32>
    %15 = arith.subf %14, %0 : vector<16x128xf32>
    %16 = arith.mulf %15, %15 : vector<16x128xf32>
    %cst_7 = arith.constant -2.500000e-01 : f32
    %17 = vector.broadcast %cst_7 : f32 to vector<16x128xf32>
    %18 = arith.mulf %17, %16 : vector<16x128xf32>
    %19 = arith.mulf %18, %1 : vector<16x128xf32>
    %cst_8 = arith.constant 1.000000e-10 : f32
    %20 = vector.broadcast %cst_8 : f32 to vector<16x128xf32>
    %21 = arith.addf %0, %20 : vector<16x128xf32>
    %22 = math.log %21 : vector<16x128xf32>
    %23 = arith.mulf %19, %22 : vector<16x128xf32>
    %24 = arith.addf %13, %23 : vector<16x128xf32>
    %c0_i32 = arith.constant 0 : i32
    %25 = arith.cmpi eq, %arg1, %c0_i32 : i32
    %26 = arith.extui %25 : i1 to i32
    %c0_i32_9 = arith.constant 0 : i32
    %27 = arith.cmpi ne, %26, %c0_i32_9 : i32
    scf.if %27 {
      %cst_14 = arith.constant 0.000000e+00 : f32
      %31 = vector.broadcast %cst_14 : f32 to vector<16x128xf32>
      %c0_15 = arith.constant 0 : index
      %c0_16 = arith.constant 0 : index
      %32 = vector.load %arg4[%c0_15, %c0_16] : memref<16x128xf32, #tpu.memory_space<vmem>>, vector<16x128xf32>
      tpu.vector_store %arg4[%c0_15, %c0_16], %31 {strides = array<i32>} : memref<16x128xf32, #tpu.memory_space<vmem>>, vector<16x128xf32>,
    } else {
    }
    %c0_10 = arith.constant 0 : index
    %c0_11 = arith.constant 0 : index
    %28 = vector.load %arg4[%c0_10, %c0_11] : memref<16x128xf32, #tpu.memory_space<vmem>>, vector<16x128xf32>
    %29 = arith.addf %28, %24 : vector<16x128xf32>
    %c0_12 = arith.constant 0 : index
    %c0_13 = arith.constant 0 : index
    %30 = vector.load %arg4[%c0_12, %c0_13] : memref<16x128xf32, #tpu.memory_space<vmem>>, vector<16x128xf32>
    tpu.vector_store %arg4[%c0_12, %c0_13], %29 {strides = array<i32>} : memref<16x128xf32, #tpu.memory_space<vmem>>, vector<16x128xf32>,
    return
  }
  func.func @transform_0(%arg0: i32, %arg1: i32) -> (i32, i32) {
    %c1_i32 = arith.constant 1 : i32
    %0 = arith.muli %arg0, %c1_i32 : i32
    %1 = arith.addi %0, %arg1 : i32
    %c0_i32 = arith.constant 0 : i32
    %c0_i32_0 = arith.constant 0 : i32
    return %1, %c0_i32 : i32, i32
  }
  func.func @transform_1(%arg0: i32, %arg1: i32) -> (i32, i32) {
    %c1_i32 = arith.constant 1 : i32
    %0 = arith.muli %arg0, %c1_i32 : i32
    %1 = arith.addi %0, %arg1 : i32
    %c0_i32 = arith.constant 0 : i32
    %c0_i32_0 = arith.constant 0 : i32
    return %1, %c0_i32 : i32, i32
  }
  func.func @transform_2(%arg0: i32, %arg1: i32) -> (i32, i32) {
    %c0_i32 = arith.constant 0 : i32
    %c0_i32_0 = arith.constant 0 : i32
    return %arg0, %c0_i32 : i32, i32
  }
}

</mosaic_0001>

<llo_original>
// kernel: tpu_custom_call.1
$region0: #{tpu_custom_call.1}
  #allocation0 [shape = 'u32[]', space=smem, size = 0x4, offset = 0x4, fixed_abs, tag = 'smem constant byte address 0x4 - core index']
  #allocation1 [shape = 'u32[72,128]{1,0:T(1,128)}', space=vmem, size = 0x9000, scoped, tag = 'internal scratch']
  %s0 = inlined_call_operand.hbm [shape: f32[16,128], index: 0, kind: input, shape index: {}]
  %s1 = inlined_call_operand.hbm [shape: f32[16,128], index: 1, kind: input, shape index: {}]
  %s2 = inlined_call_operand.hbm [shape: f32[16,128], index: 2, kind: output, shape index: {}]
  %s3 = sld [smem:[#allocation0]]
  $region30: #{tpu_custom_call.1} parent=0
    _
  %s5 = ssub.s32 1, %s3
  %s6 = scalar_select 0, %s5, %s3
  $region1: #{tpu_custom_call.1} parent=0
    #allocation2 [shape = 'u8[8192]{0}', space=vmem, size = 0x2000, scoped, tag = 'input window, operand 0, single buffered']
    #allocation3 [shape = 's32[1]{0}', space=sflag, size = 0x4, scoped, tag = 'scoped memory for tpu_custom_call.1']
    #allocation4 [shape = 's32[1]{0}', space=sflag, size = 0x4, scoped, tag = 'scoped memory for tpu_custom_call.1']
    #allocation5 [shape = 'u8[8192]{0}', space=vmem, size = 0x2000, scoped, tag = 'input window, operand 1, single buffered']
    #allocation6 [shape = 's32[1]{0}', space=sflag, size = 0x4, scoped, tag = 'scoped memory for tpu_custom_call.1']
    #allocation7 [shape = 'u8[8192]{0}', space=vmem, size = 0x2000, scoped, tag = 'output window, operand 0, single buffered']
    %7 = vsyncpa [#allocation3], 0
    %8 = vsyncpa [#allocation6], 0
    %9 = vsyncpa [#allocation4], 0
    // Predicated region
    $region2: #{tpu_custom_call.1} parent=1 // pred_check
      _
    $region3: #{tpu_custom_call.1} parent=1 // pred_check_branch
      %11 = sbr.rel (0) target = $region5
    $region4: #{tpu_custom_call.1} parent=1 // pred_region
      %s12 = sadd.s32 0, 0
      %s13 = smul.u32 2, %s12
      %15 = vsyncadd [#allocation3], 0
      %s16 = smul.addr %s13, 8
      %s17 = scalar_lea.hbm %s0, %s16
      %s18 = sshll.u32 %s17, 4
      %s19 = int_to_ptr.hbm [resolvable:$true] %s18
      %s20 = sshll.u32 [#allocation2], 4
      %s21 = int_to_ptr.vmem [resolvable:$true] %s20
      %26 = dma.hbm_to_vmem [thread:$0]  %s19, 256, %s21, [#allocation3], 128, 128, 8
    $region5: #{tpu_custom_call.1} parent=1 // pred_fallthru
      _
    // Predicated region
    $region6: #{tpu_custom_call.1} parent=1 // pred_check
      _
    $region7: #{tpu_custom_call.1} parent=1 // pred_check_branch
      %28 = sbr.rel (0) target = $region9
    $region8: #{tpu_custom_call.1} parent=1 // pred_region
      %s29 = sadd.s32 0, 0
      %s30 = smul.u32 2, %s29
      %32 = vsyncadd [#allocation6], 0
      %s33 = smul.addr %s30, 8
      %s34 = scalar_lea.hbm %s1, %s33
      %s35 = sshll.u32 %s34, 4
      %s36 = int_to_ptr.hbm [resolvable:$true] %s35
      %s37 = sshll.u32 [#allocation5], 4
      %s38 = int_to_ptr.vmem [resolvable:$true] %s37
      %43 = dma.hbm_to_vmem [thread:$0]  %s36, 256, %s38, [#allocation6], 128, 128, 8
    $region9: #{tpu_custom_call.1} parent=1 // pred_fallthru
      _
    // Predicated region
    $region10: #{tpu_custom_call.1} parent=1 // pred_check
      _
    $region11: #{tpu_custom_call.1} parent=1 // pred_check_branch
      %45 = sbr.rel (0) target = $region13
    $region12: #{tpu_custom_call.1} parent=1 // pred_region
      %47 = dma.done [#allocation3], 256
    $region13: #{tpu_custom_call.1} parent=1 // pred_fallthru
      _
    // Predicated region
    $region14: #{tpu_custom_call.1} parent=1 // pred_check
      _
    $region15: #{tpu_custom_call.1} parent=1 // pred_check_branch
      %49 = sbr.rel (0) target = $region17
    $region16: #{tpu_custom_call.1} parent=1 // pred_region
      %51 = dma.done [#allocation6], 256
    $region17: #{tpu_custom_call.1} parent=1 // pred_fallthru
      _
    %s52 = sadd.s32 0, 0
    %s53 = smul.u32 2, %s52
    %s54 = sadd.s32 0, 0
    %s55 = smul.u32 2, %s54
    %v56 = vld [vmem:[#allocation2] sm:$0xff]
    %v57 = vld [vmem:[#allocation2 + $0x8] sm:$0xff]
    %v58 = vld [vmem:[#allocation5] sm:$0xff]
    %v59 = vld [vmem:[#allocation5 + $0x8] sm:$0xff]
    %v60 = vmul.f32 %v56, %v56
    %v61 = vmul.f32 %v57, %v57
    %v62 = vmul.f32 %v60, -0.25
    %v63 = vmul.f32 %v61, -0.25
    %v64 = vsub.f32 1.0, %v58
    %v65 = vsub.f32 1.0, %v59
    %v66 = vmul.f32 %v62, %v64
    %v67 = vmul.f32 %v63, %v65
    %v68 = vsub.f32 1.0, %v56
    %v69 = vsub.f32 1.0, %v57
    %v70 = vadd.f32 %v68, 1e-10
    %v71 = vadd.f32 %v69, 1e-10
    %v72 = vlog2.pop %v70
    %v73 = vmul.f32 %v72, 0.6931472
    %v74 = vlog2.pop %v71
    %v75 = vmul.f32 %v74, 0.6931472
    %v76 = vmul.f32 %v66, %v73
    %v77 = vmul.f32 %v67, %v75
    %v78 = vmul.f32 %v68, %v68
    %v79 = vmul.f32 %v69, %v69
    %v80 = vmul.f32 %v78, -0.25
    %v81 = vmul.f32 %v79, -0.25
    %v82 = vmul.f32 %v80, %v58
    %v83 = vmul.f32 %v81, %v59
    %v84 = vadd.f32 %v56, 1e-10
    %v85 = vadd.f32 %v57, 1e-10
    %v86 = vlog2.pop %v84
    %v87 = vmul.f32 %v86, 0.6931472
    %v88 = vlog2.pop %v85
    %v89 = vmul.f32 %v88, 0.6931472
    %v90 = vmul.f32 %v82, %v87
    %v91 = vmul.f32 %v83, %v89
    %v92 = vadd.f32 %v76, %v90
    %v93 = vadd.f32 %v77, %v91
    %p94 = scmp.eq.s32.totalorder 0, 0
    // Predicated region
    $region18: #{tpu_custom_call.1} parent=1 // pred_check
      %p95 = pneg %p94
    $region19: #{tpu_custom_call.1} parent=1 // pred_check_branch
      %97 = sbr.rel (%p95) target = $region21
    $region20: #{tpu_custom_call.1} parent=1 // pred_region
      %98 = vst [vmem:[#allocation7] sm:$0xff] 0.0
      %99 = vst [vmem:[#allocation7 + $0x8] sm:$0xff] 0.0
    $region21: #{tpu_custom_call.1} parent=1 // pred_fallthru
      _
    %v100 = vld [vmem:[#allocation7] sm:$0xff]
    %v101 = vld [vmem:[#allocation7 + $0x8] sm:$0xff]
    %v102 = vadd.f32 %v100, %v92
    %v103 = vadd.f32 %v101, %v93
    %104 = vst [vmem:[#allocation7] sm:$0xff] %v102
    %105 = vst [vmem:[#allocation7 + $0x8] sm:$0xff] %v103
    // Predicated region
    $region22: #{tpu_custom_call.1} parent=1 // pred_check
      _
    $region23: #{tpu_custom_call.1} parent=1 // pred_check_branch
      %107 = sbr.rel (0) target = $region25
    $region24: #{tpu_custom_call.1} parent=1 // pred_region
      %109 = vsyncadd [#allocation4], 0
      %s110 = sshll.u32 [#allocation7], 4
      %s111 = int_to_ptr.vmem [resolvable:$true] %s110
      %s112 = sshll.u32 %s2, 4
      %s113 = int_to_ptr.hbm [resolvable:$true] %s112
      %118 = dma.vmem_to_hbm [thread:$0]  %s111, 256, %s113, [#allocation4], 128, 128, 8
    $region25: #{tpu_custom_call.1} parent=1 // pred_fallthru
      _
    // Predicated region
    $region26: #{tpu_custom_call.1} parent=1 // pred_check
      _
    $region27: #{tpu_custom_call.1} parent=1 // pred_check_branch
      %120 = sbr.rel (0) target = $region29
    $region28: #{tpu_custom_call.1} parent=1 // pred_region
      %122 = dma.done [#allocation4], 256
    $region29: #{tpu_custom_call.1} parent=1 // pred_fallthru
      _
    %123 = vsyncpa [#allocation3], 1
    %124 = vsyncpa [#allocation6], 1
    %125 = vsyncpa [#allocation4], 1

</llo_original>
